<compile_context>
chip_gen: v7x
topology: tpu7x:2x2x1
jax: 0.10.0
libtpu: 0.0.40
codegen_flags: <defaults>
</compile_context>

<pallas_src>
import jax
import jax.numpy as jnp
import numpy as np
from jax.experimental import pallas as pl
from jax.experimental.pallas import tpu as pltpu

KH, KW = 3, 3


def _shift_cols(x, off):
    """y[:, m] = x[:, m + off] if 0 <= m + off < size else 0   (static off)."""
    if off == 0:
        return x
    c, m = x.shape
    z = jnp.zeros((c, abs(off)), x.dtype)
    if off > 0:
        return jnp.concatenate([x[:, off:], z], axis=-1)
    return jnp.concatenate([z, x[:, : m + off]], axis=-1)


def make_conv_cir_kernel(H, W, C_in, C_out, n):
    M = H * W

    def kernel(w_ref, b_ref, x_ref, o_ref):
        # w_ref : (KH*KW, C_out, C_in)  -- resident across the whole grid
        # b_ref : (C_out, 1)            -- resident
        # x_ref : (1, C_in, M)          -- flattened image for this batch element
        # o_ref : (1, C_out, M)         -- flattened W-periodic output core
        xf = x_ref[0]                                              # (C_in, M)
        col = jax.lax.broadcasted_iota(jnp.int32, (C_in, M), 1) % W
        acc = jnp.zeros((C_out, M), jnp.float32)

        for kh in range(KH):
            for kw in range(KW):
                d = kw - n                     # circular column offset (over W)
                off = (kh - 1) * W + d         # flat offset; H-pad rows -> zeros
                main = _shift_cols(xf, off)
                if d < 0:                      # wrap around the left edge
                    wrap = _shift_cols(xf, off + W)
                    tap = jnp.where(col < -d, wrap, main)
                elif d > 0:                    # wrap around the right edge
                    wrap = _shift_cols(xf, off - W)
                    tap = jnp.where(col >= W - d, wrap, main)
                else:
                    tap = main
                acc = acc + jnp.dot(w_ref[kh * KW + kw], tap,
                                    preferred_element_type=jnp.float32)

        o_ref[0] = (acc + b_ref[...]).astype(o_ref.dtype)

    return kernel


def conv2d_cir(x_nchw, weight, bias, n=1):
    """Forward pass of Conv2d_cir.

    x_nchw : (N, C_in, H, W)        float32
    weight : (C_out, C_in, KH, KW)  float32 (PyTorch layout)
    bias   : (C_out,)               float32
    returns (N, C_out, H, W + 2n - 2)  -- matches the PyTorch module output
    """
    N, C_in, H, W = x_nchw.shape
    C_out = weight.shape[0]
    assert weight.shape == (C_out, C_in, KH, KW)
    assert 1 <= n < W, "fused circular pad assumes 1 <= n < W"

    M = H * W
    W_out = W + 2 * n - 2
    itemsize = jnp.dtype(x_nchw.dtype).itemsize

    # Weight taps in (kh, kw)-major order; bias as a column for lane broadcast.
    w_taps = jnp.transpose(weight, (2, 3, 0, 1)).reshape(KH * KW, C_out, C_in)
    b_col = bias.reshape(C_out, 1)

    # Free reshape (metadata only): flatten the spatial dims.
    x_flat = x_nchw.reshape(N, C_in, M)

    cost = pl.CostEstimate(
        flops=2 * N * M * (KH * KW * C_in) * C_out,
        transcendentals=0,
        bytes_accessed=(x_flat.size + N * C_out * M
                        + w_taps.size + b_col.size) * itemsize,
    )

    kernel = make_conv_cir_kernel(H, W, C_in, C_out, n)

    out_flat = pl.pallas_call(
        kernel,
        out_shape=jax.ShapeDtypeStruct((N, C_out, M), x_nchw.dtype),
        grid=(N,),
        in_specs=[
            pl.BlockSpec((KH * KW, C_out, C_in), lambda b: (0, 0, 0)),  # weights
            pl.BlockSpec((C_out, 1), lambda b: (0, 0)),                 # bias
            pl.BlockSpec((1, C_in, M), lambda b: (b, 0, 0)),            # image
        ],
        out_specs=pl.BlockSpec((1, C_out, M), lambda b: (b, 0, 0)),
        compiler_params=pltpu.CompilerParams(dimension_semantics=("parallel",)),
        cost_estimate=cost,
    )(w_taps, b_col, x_flat)

    # Free reshape back to NCHW.  For n == 1 (the module default) W_out == W
    # and this is the final output; for n > 1 the output columns are a
    # W-periodic expansion of the core (cheap gather in the glue).
    core = out_flat.reshape(N, C_out, H, W)
    if W_out == W:
        return core
    return core[..., jnp.arange(W_out) % W]


def _reference(x_nchw, weight, bias, n=1):
    """Pure-JAX reference of the PyTorch forward (for correctness check)."""
    x_cir = jnp.concatenate(
        [x_nchw[:, :, :, -n:], x_nchw, x_nchw[:, :, :, :n]], axis=-1)
    x_pad = jnp.pad(x_cir, ((0, 0), (0, 0), (1, 1), (0, 0)))
    out = jax.lax.conv_general_dilated(
        x_pad, weight, window_strides=(1, 1), padding="VALID",
        dimension_numbers=("NCHW", "OIHW", "NCHW"))
    return out + bias[None, :, None, None]


if __name__ == "__main__":
    key = jax.random.PRNGKey(0)
    k_x, k_w, k_b = jax.random.split(key, 3)

    # Shapes implied by the module: NCHW input, in_dim=4, out_dim=8, n=1
    N, C_in, H, W = 2, 4, 16, 16
    C_out = 8
    n = 1

    x = jax.random.normal(k_x, (N, C_in, H, W), dtype=jnp.float32)
    fan_in = C_in * KH * KW
    bound = 1.0 / np.sqrt(fan_in)
    weight = jax.random.uniform(k_w, (C_out, C_in, KH, KW),
                                minval=-bound, maxval=bound, dtype=jnp.float32)
    bias = jax.random.uniform(k_b, (C_out,),
                              minval=-bound, maxval=bound, dtype=jnp.float32)

    out = jax.block_until_ready(conv2d_cir(x, weight, bias, n=n))
    ref = jax.block_until_ready(_reference(x, weight, bias, n=n))

    assert out.shape == (N, C_out, H, W + 2 * n - 2), out.shape
    np.testing.assert_allclose(np.asarray(out), np.asarray(ref),
                               rtol=1e-4, atol=1e-4)

    print("KERNEL_OK")
</pallas_src>

<mosaic_0001>
module attributes {stable_mosaic.version = 11 : i64} {
  func.func @kernel(%arg0: i32, %arg1: memref<9x8x4xf32, #tpu.memory_space<vmem>>, %arg2: memref<8x1xf32, #tpu.memory_space<vmem>>, %arg3: memref<1x4x256xf32, #tpu.memory_space<vmem>>, %arg4: memref<1x8x256xf32, #tpu.memory_space<vmem>>) attributes {dimension_semantics = [#tpu.dimension_semantics<parallel>], iteration_bounds = array<i64: 2>, scalar_prefetch = 0 : i64, scratch_operands = 0 : i64, tpu.core_type = #tpu.core_type<tc>, window_params = [{pipeline_mode = #tpu.pipeline_mode<synchronous>, transform_indices = @transform_0, window_bounds = array<i64: 9, 8, 4>}, {pipeline_mode = #tpu.pipeline_mode<synchronous>, transform_indices = @transform_1, window_bounds = array<i64: 8, 1>}, {transform_indices = @transform_2, window_bounds = array<i64: 1, 4, 256>}, {transform_indices = @transform_3, window_bounds = array<i64: 1, 8, 256>}]} {
    %c0 = arith.constant 0 : index
    %c0_0 = arith.constant 0 : index
    %c0_1 = arith.constant 0 : index
    %0 = vector.load %arg3[%c0, %c0_0, %c0_1] : memref<1x4x256xf32, #tpu.memory_space<vmem>>, vector<1x4x256xf32>
    %1 = vector.shape_cast %0 : vector<1x4x256xf32> to vector<4x256xf32>
    %2 = tpu.iota {dimensions = array<i32: 1>} : vector<4x256xi32>
    %c16_i32 = arith.constant 16 : i32
    %c0_i32 = arith.constant 0 : i32
    %3 = arith.cmpi eq, %c16_i32, %c0_i32 : i32
    %c1_i32 = arith.constant 1 : i32
    %4 = arith.select %3, %c1_i32, %c16_i32 : i32
    %5 = vector.broadcast %4 : i32 to vector<4x256xi32>
    %6 = arith.remsi %2, %5 : vector<4x256xi32>
    %c0_i32_2 = arith.constant 0 : i32
    %7 = vector.broadcast %c0_i32_2 : i32 to vector<4x256xi32>
    %8 = arith.cmpi ne, %6, %7 : vector<4x256xi32>
    %c0_i32_3 = arith.constant 0 : i32
    %9 = vector.broadcast %c0_i32_3 : i32 to vector<4x256xi32>
    %10 = arith.cmpi slt, %6, %9 : vector<4x256xi32>
    %c0_i32_4 = arith.constant 0 : i32
    %11 = arith.cmpi slt, %4, %c0_i32_4 : i32
    %12 = vector.broadcast %11 : i1 to vector<4x256xi1>
    %13 = vector.broadcast %12 : vector<4x256xi1> to vector<4x256xi1>
    %14 = arith.xori %10, %13 : vector<4x256xi1>
    %15 = arith.andi %14, %8 : vector<4x256xi1>
    %16 = vector.broadcast %4 : i32 to vector<4x256xi32>
    %17 = arith.addi %6, %16 : vector<4x256xi32>
    %18 = arith.select %15, %17, %6 : vector<4x256xi1>, vector<4x256xi32>
    %cst = arith.constant 0.000000e+00 : f32
    %19 = vector.broadcast %cst : f32 to vector<8x256xf32>
    %cst_5 = arith.constant 0.000000e+00 : f32
    %20 = vector.broadcast %cst_5 : f32 to vector<4x17xf32>
    %21 = vector.extract_strided_slice %1 {offsets = [0, 0], sizes = [4, 239], strides = [1, 1]} : vector<4x256xf32> to vector<4x239xf32>
    %22 = tpu.concatenate %20, %21 in 1 : vector<4x17xf32>, vector<4x239xf32> -> vector<4x256xf32>
    %cst_6 = arith.constant 0.000000e+00 : f32
    %23 = vector.broadcast %cst_6 : f32 to vector<4x1xf32>
    %24 = vector.extract_strided_slice %1 {offsets = [0, 0], sizes = [4, 255], strides = [1, 1]} : vector<4x256xf32> to vector<4x255xf32>
    %25 = tpu.concatenate %23, %24 in 1 : vector<4x1xf32>, vector<4x255xf32> -> vector<4x256xf32>
    %c1_i32_7 = arith.constant 1 : i32
    %26 = vector.broadcast %c1_i32_7 : i32 to vector<4x256xi32>
    %27 = arith.cmpi slt, %18, %26 : vector<4x256xi32>
    %28 = arith.select %27, %25, %22 : vector<4x256xi1>, vector<4x256xf32>
    %c0_8 = arith.constant 0 : index
    %c0_9 = arith.constant 0 : index
    %c0_10 = arith.constant 0 : index
    %29 = vector.load %arg1[%c0_8, %c0_9, %c0_10] : memref<9x8x4xf32, #tpu.memory_space<vmem>>, vector<1x8x4xf32>
    %30 = vector.shape_cast %29 : vector<1x8x4xf32> to vector<8x4xf32>
    %cst_11 = arith.constant dense<0.000000e+00> : vector<8x256xf32>
    %31 = tpu.matmul %30, %28, %cst_11 {dimension_numbers = #tpu.dot_dimension_numbers<[1], [0], [0], [1], [0, 0, 1, 1], [], []>} : vector<8x4xf32>, vector<4x256xf32>, vector<8x256xf32> -> vector<8x256xf32>
    %32 = arith.addf %19, %31 : vector<8x256xf32>
    %cst_12 = arith.constant 0.000000e+00 : f32
    %33 = vector.broadcast %cst_12 : f32 to vector<4x16xf32>
    %34 = vector.extract_strided_slice %1 {offsets = [0, 0], sizes = [4, 240], strides = [1, 1]} : vector<4x256xf32> to vector<4x240xf32>
    %35 = tpu.concatenate %33, %34 in 1 : vector<4x16xf32>, vector<4x240xf32> -> vector<4x256xf32>
    %c1 = arith.constant 1 : index
    %c0_13 = arith.constant 0 : index
    %c0_14 = arith.constant 0 : index
    %36 = vector.load %arg1[%c1, %c0_13, %c0_14] : memref<9x8x4xf32, #tpu.memory_space<vmem>>, vector<1x8x4xf32>
    %37 = vector.shape_cast %36 : vector<1x8x4xf32> to vector<8x4xf32>
    %cst_15 = arith.constant dense<0.000000e+00> : vector<8x256xf32>
    %38 = tpu.matmul %37, %35, %cst_15 {dimension_numbers = #tpu.dot_dimension_numbers<[1], [0], [0], [1], [0, 0, 1, 1], [], []>} : vector<8x4xf32>, vector<4x256xf32>, vector<8x256xf32> -> vector<8x256xf32>
    %39 = arith.addf %32, %38 : vector<8x256xf32>
    %cst_16 = arith.constant 0.000000e+00 : f32
    %40 = vector.broadcast %cst_16 : f32 to vector<4x15xf32>
    %41 = vector.extract_strided_slice %1 {offsets = [0, 0], sizes = [4, 241], strides = [1, 1]} : vector<4x256xf32> to vector<4x241xf32>
    %42 = tpu.concatenate %40, %41 in 1 : vector<4x15xf32>, vector<4x241xf32> -> vector<4x256xf32>
    %cst_17 = arith.constant 0.000000e+00 : f32
    %43 = vector.broadcast %cst_17 : f32 to vector<4x31xf32>
    %44 = vector.extract_strided_slice %1 {offsets = [0, 0], sizes = [4, 225], strides = [1, 1]} : vector<4x256xf32> to vector<4x225xf32>
    %45 = tpu.concatenate %43, %44 in 1 : vector<4x31xf32>, vector<4x225xf32> -> vector<4x256xf32>
    %c15_i32 = arith.constant 15 : i32
    %46 = vector.broadcast %c15_i32 : i32 to vector<4x256xi32>
    %47 = arith.cmpi sge, %18, %46 : vector<4x256xi32>
    %48 = arith.select %47, %45, %42 : vector<4x256xi1>, vector<4x256xf32>
    %c2 = arith.constant 2 : index
    %c0_18 = arith.constant 0 : index
    %c0_19 = arith.constant 0 : index
    %49 = vector.load %arg1[%c2, %c0_18, %c0_19] : memref<9x8x4xf32, #tpu.memory_space<vmem>>, vector<1x8x4xf32>
    %50 = vector.shape_cast %49 : vector<1x8x4xf32> to vector<8x4xf32>
    %cst_20 = arith.constant dense<0.000000e+00> : vector<8x256xf32>
    %51 = tpu.matmul %50, %48, %cst_20 {dimension_numbers = #tpu.dot_dimension_numbers<[1], [0], [0], [1], [0, 0, 1, 1], [], []>} : vector<8x4xf32>, vector<4x256xf32>, vector<8x256xf32> -> vector<8x256xf32>
    %52 = arith.addf %39, %51 : vector<8x256xf32>
    %cst_21 = arith.constant 0.000000e+00 : f32
    %53 = vector.broadcast %cst_21 : f32 to vector<4x1xf32>
    %54 = vector.extract_strided_slice %1 {offsets = [0, 0], sizes = [4, 255], strides = [1, 1]} : vector<4x256xf32> to vector<4x255xf32>
    %55 = tpu.concatenate %53, %54 in 1 : vector<4x1xf32>, vector<4x255xf32> -> vector<4x256xf32>
    %cst_22 = arith.constant 0.000000e+00 : f32
    %56 = vector.broadcast %cst_22 : f32 to vector<4x15xf32>
    %57 = vector.extract_strided_slice %1 {offsets = [0, 15], sizes = [4, 241], strides = [1, 1]} : vector<4x256xf32> to vector<4x241xf32>
    %58 = tpu.concatenate %57, %56 in 1 : vector<4x241xf32>, vector<4x15xf32> -> vector<4x256xf32>
    %c1_i32_23 = arith.constant 1 : i32
    %59 = vector.broadcast %c1_i32_23 : i32 to vector<4x256xi32>
    %60 = arith.cmpi slt, %18, %59 : vector<4x256xi32>
    %61 = arith.select %60, %58, %55 : vector<4x256xi1>, vector<4x256xf32>
    %c3 = arith.constant 3 : index
    %c0_24 = arith.constant 0 : index
    %c0_25 = arith.constant 0 : index
    %62 = vector.load %arg1[%c3, %c0_24, %c0_25] : memref<9x8x4xf32, #tpu.memory_space<vmem>>, vector<1x8x4xf32>
    %63 = vector.shape_cast %62 : vector<1x8x4xf32> to vector<8x4xf32>
    %cst_26 = arith.constant dense<0.000000e+00> : vector<8x256xf32>
    %64 = tpu.matmul %63, %61, %cst_26 {dimension_numbers = #tpu.dot_dimension_numbers<[1], [0], [0], [1], [0, 0, 1, 1], [], []>} : vector<8x4xf32>, vector<4x256xf32>, vector<8x256xf32> -> vector<8x256xf32>
    %65 = arith.addf %52, %64 : vector<8x256xf32>
    %c4 = arith.constant 4 : index
    %c0_27 = arith.constant 0 : index
    %c0_28 = arith.constant 0 : index
    %66 = vector.load %arg1[%c4, %c0_27, %c0_28] : memref<9x8x4xf32, #tpu.memory_space<vmem>>, vector<1x8x4xf32>
    %67 = vector.shape_cast %66 : vector<1x8x4xf32> to vector<8x4xf32>
    %cst_29 = arith.constant dense<0.000000e+00> : vector<8x256xf32>
    %68 = tpu.matmul %67, %1, %cst_29 {dimension_numbers = #tpu.dot_dimension_numbers<[1], [0], [0], [1], [0, 0, 1, 1], [], []>} : vector<8x4xf32>, vector<4x256xf32>, vector<8x256xf32> -> vector<8x256xf32>
    %69 = arith.addf %65, %68 : vector<8x256xf32>
    %cst_30 = arith.constant 0.000000e+00 : f32
    %70 = vector.broadcast %cst_30 : f32 to vector<4x1xf32>
    %71 = vector.extract_strided_slice %1 {offsets = [0, 1], sizes = [4, 255], strides = [1, 1]} : vector<4x256xf32> to vector<4x255xf32>
    %72 = tpu.concatenate %71, %70 in 1 : vector<4x255xf32>, vector<4x1xf32> -> vector<4x256xf32>
    %cst_31 = arith.constant 0.000000e+00 : f32
    %73 = vector.broadcast %cst_31 : f32 to vector<4x15xf32>
    %74 = vector.extract_strided_slice %1 {offsets = [0, 0], sizes = [4, 241], strides = [1, 1]} : vector<4x256xf32> to vector<4x241xf32>
    %75 = tpu.concatenate %73, %74 in 1 : vector<4x15xf32>, vector<4x241xf32> -> vector<4x256xf32>
    %c15_i32_32 = arith.constant 15 : i32
    %76 = vector.broadcast %c15_i32_32 : i32 to vector<4x256xi32>
    %77 = arith.cmpi sge, %18, %76 : vector<4x256xi32>
    %78 = arith.select %77, %75, %72 : vector<4x256xi1>, vector<4x256xf32>
    %c5 = arith.constant 5 : index
    %c0_33 = arith.constant 0 : index
    %c0_34 = arith.constant 0 : index
    %79 = vector.load %arg1[%c5, %c0_33, %c0_34] : memref<9x8x4xf32, #tpu.memory_space<vmem>>, vector<1x8x4xf32>
    %80 = vector.shape_cast %79 : vector<1x8x4xf32> to vector<8x4xf32>
    %cst_35 = arith.constant dense<0.000000e+00> : vector<8x256xf32>
    %81 = tpu.matmul %80, %78, %cst_35 {dimension_numbers = #tpu.dot_dimension_numbers<[1], [0], [0], [1], [0, 0, 1, 1], [], []>} : vector<8x4xf32>, vector<4x256xf32>, vector<8x256xf32> -> vector<8x256xf32>
    %82 = arith.addf %69, %81 : vector<8x256xf32>
    %cst_36 = arith.constant 0.000000e+00 : f32
    %83 = vector.broadcast %cst_36 : f32 to vector<4x15xf32>
    %84 = vector.extract_strided_slice %1 {offsets = [0, 15], sizes = [4, 241], strides = [1, 1]} : vector<4x256xf32> to vector<4x241xf32>
    %85 = tpu.concatenate %84, %83 in 1 : vector<4x241xf32>, vector<4x15xf32> -> vector<4x256xf32>
    %cst_37 = arith.constant 0.000000e+00 : f32
    %86 = vector.broadcast %cst_37 : f32 to vector<4x31xf32>
    %87 = vector.extract_strided_slice %1 {offsets = [0, 31], sizes = [4, 225], strides = [1, 1]} : vector<4x256xf32> to vector<4x225xf32>
    %88 = tpu.concatenate %87, %86 in 1 : vector<4x225xf32>, vector<4x31xf32> -> vector<4x256xf32>
    %c1_i32_38 = arith.constant 1 : i32
    %89 = vector.broadcast %c1_i32_38 : i32 to vector<4x256xi32>
    %90 = arith.cmpi slt, %18, %89 : vector<4x256xi32>
    %91 = arith.select %90, %88, %85 : vector<4x256xi1>, vector<4x256xf32>
    %c6 = arith.constant 6 : index
    %c0_39 = arith.constant 0 : index
    %c0_40 = arith.constant 0 : index
    %92 = vector.load %arg1[%c6, %c0_39, %c0_40] : memref<9x8x4xf32, #tpu.memory_space<vmem>>, vector<1x8x4xf32>
    %93 = vector.shape_cast %92 : vector<1x8x4xf32> to vector<8x4xf32>
    %cst_41 = arith.constant dense<0.000000e+00> : vector<8x256xf32>
    %94 = tpu.matmul %93, %91, %cst_41 {dimension_numbers = #tpu.dot_dimension_numbers<[1], [0], [0], [1], [0, 0, 1, 1], [], []>} : vector<8x4xf32>, vector<4x256xf32>, vector<8x256xf32> -> vector<8x256xf32>
    %95 = arith.addf %82, %94 : vector<8x256xf32>
    %cst_42 = arith.constant 0.000000e+00 : f32
    %96 = vector.broadcast %cst_42 : f32 to vector<4x16xf32>
    %97 = vector.extract_strided_slice %1 {offsets = [0, 16], sizes = [4, 240], strides = [1, 1]} : vector<4x256xf32> to vector<4x240xf32>
    %98 = tpu.concatenate %97, %96 in 1 : vector<4x240xf32>, vector<4x16xf32> -> vector<4x256xf32>
    %c7 = arith.constant 7 : index
    %c0_43 = arith.constant 0 : index
    %c0_44 = arith.constant 0 : index
    %99 = vector.load %arg1[%c7, %c0_43, %c0_44] : memref<9x8x4xf32, #tpu.memory_space<vmem>>, vector<1x8x4xf32>
    %100 = vector.shape_cast %99 : vector<1x8x4xf32> to vector<8x4xf32>
    %cst_45 = arith.constant dense<0.000000e+00> : vector<8x256xf32>
    %101 = tpu.matmul %100, %98, %cst_45 {dimension_numbers = #tpu.dot_dimension_numbers<[1], [0], [0], [1], [0, 0, 1, 1], [], []>} : vector<8x4xf32>, vector<4x256xf32>, vector<8x256xf32> -> vector<8x256xf32>
    %102 = arith.addf %95, %101 : vector<8x256xf32>
    %cst_46 = arith.constant 0.000000e+00 : f32
    %103 = vector.broadcast %cst_46 : f32 to vector<4x17xf32>
    %104 = vector.extract_strided_slice %1 {offsets = [0, 17], sizes = [4, 239], strides = [1, 1]} : vector<4x256xf32> to vector<4x239xf32>
    %105 = tpu.concatenate %104, %103 in 1 : vector<4x239xf32>, vector<4x17xf32> -> vector<4x256xf32>
    %cst_47 = arith.constant 0.000000e+00 : f32
    %106 = vector.broadcast %cst_47 : f32 to vector<4x1xf32>
    %107 = vector.extract_strided_slice %1 {offsets = [0, 1], sizes = [4, 255], strides = [1, 1]} : vector<4x256xf32> to vector<4x255xf32>
    %108 = tpu.concatenate %107, %106 in 1 : vector<4x255xf32>, vector<4x1xf32> -> vector<4x256xf32>
    %c15_i32_48 = arith.constant 15 : i32
    %109 = vector.broadcast %c15_i32_48 : i32 to vector<4x256xi32>
    %110 = arith.cmpi sge, %18, %109 : vector<4x256xi32>
    %111 = arith.select %110, %108, %105 : vector<4x256xi1>, vector<4x256xf32>
    %c8 = arith.constant 8 : index
    %c0_49 = arith.constant 0 : index
    %c0_50 = arith.constant 0 : index
    %112 = vector.load %arg1[%c8, %c0_49, %c0_50] : memref<9x8x4xf32, #tpu.memory_space<vmem>>, vector<1x8x4xf32>
    %113 = vector.shape_cast %112 : vector<1x8x4xf32> to vector<8x4xf32>
    %cst_51 = arith.constant dense<0.000000e+00> : vector<8x256xf32>
    %114 = tpu.matmul %113, %111, %cst_51 {dimension_numbers = #tpu.dot_dimension_numbers<[1], [0], [0], [1], [0, 0, 1, 1], [], []>} : vector<8x4xf32>, vector<4x256xf32>, vector<8x256xf32> -> vector<8x256xf32>
    %115 = arith.addf %102, %114 : vector<8x256xf32>
    %c0_52 = arith.constant 0 : index
    %c0_53 = arith.constant 0 : index
    %116 = vector.load %arg2[%c0_52, %c0_53] : memref<8x1xf32, #tpu.memory_space<vmem>>, vector<8x1xf32>
    %117 = vector.broadcast %116 : vector<8x1xf32> to vector<8x256xf32>
    %118 = arith.addf %115, %117 : vector<8x256xf32>
    %c0_54 = arith.constant 0 : index
    %c0_55 = arith.constant 0 : index
    %c0_56 = arith.constant 0 : index
    %119 = vector.load %arg4[%c0_54, %c0_55, %c0_56] : memref<1x8x256xf32, #tpu.memory_space<vmem>>, vector<1x8x256xf32>
    %120 = vector.shape_cast %119 : vector<1x8x256xf32> to vector<8x256xf32>
    %121 = vector.shape_cast %118 : vector<8x256xf32> to vector<1x8x256xf32>
    tpu.vector_store %arg4[%c0_54, %c0_55, %c0_56], %121 {strides = array<i32>} : memref<1x8x256xf32, #tpu.memory_space<vmem>>, vector<1x8x256xf32>,
    return
  }
  func.func @transform_0(%arg0: i32) -> (i32, i32, i32) {
    %c0_i32 = arith.constant 0 : i32
    %c0_i32_0 = arith.constant 0 : i32
    %c0_i32_1 = arith.constant 0 : i32
    %c0_i32_2 = arith.constant 0 : i32
    return %c0_i32, %c0_i32_0, %c0_i32_1 : i32, i32, i32
  }
  func.func @transform_1(%arg0: i32) -> (i32, i32) {
    %c0_i32 = arith.constant 0 : i32
    %c0_i32_0 = arith.constant 0 : i32
    %c0_i32_1 = arith.constant 0 : i32
    return %c0_i32, %c0_i32_0 : i32, i32
  }
  func.func @transform_2(%arg0: i32) -> (i32, i32, i32) {
    %c0_i32 = arith.constant 0 : i32
    %c0_i32_0 = arith.constant 0 : i32
    %c0_i32_1 = arith.constant 0 : i32
    return %arg0, %c0_i32, %c0_i32_0 : i32, i32, i32
  }
  func.func @transform_3(%arg0: i32) -> (i32, i32, i32) {
    %c0_i32 = arith.constant 0 : i32
    %c0_i32_0 = arith.constant 0 : i32
    %c0_i32_1 = arith.constant 0 : i32
    return %arg0, %c0_i32, %c0_i32_0 : i32, i32, i32
  }
}

</mosaic_0001>

<llo_original>
// kernel: tpu_custom_call.1
$region0: #{tpu_custom_call.1}
  #allocation0 [shape = 'u32[]', space=smem, size = 0x4, offset = 0x4, fixed_abs, tag = 'smem constant byte address 0x4 - core index']
  #allocation1 [shape = 'u32[144,128]{1,0:T(1,128)}', space=vmem, size = 0x12000, scoped, tag = 'internal scratch']
  %s0 = inlined_call_operand.vmem [shape: f32[9,8,4], index: 0, kind: input, shape index: {}]
  %s1 = inlined_call_operand.vmem [shape: f32[8,1], index: 1, kind: input, shape index: {}]
  %s2 = inlined_call_operand.vmem [shape: f32[2,4,256], index: 2, kind: input, shape index: {}]
  %s3 = inlined_call_operand.hbm [shape: f32[2,8,256], index: 3, kind: output, shape index: {}]
  %s4 = sld [smem:[#allocation0]]
  $region45: #{tpu_custom_call.1} parent=0
    _
  %s6 = ssub.s32 1, %s4
  %s7 = scalar_select 0, %s6, %s4
  $region1: #{tpu_custom_call.1} parent=0
    #allocation2 [shape = 'u8[16384]{0}', space=vmem, size = 0x4000, scoped, tag = 'output window, operand 0']
    #allocation3 [shape = 's32[2]{0}', space=sflag, size = 0x8, scoped, tag = 'scoped memory for tpu_custom_call.1']
    %8 = vsyncpa [#allocation3], 0
    %s9 = scalar_lea.sflag [#allocation3], 1
    %10 = vsyncpa %s9, 0
    loop: start=0, step=1, limit=4
    $region2: #{tpu_custom_call.1} parent=1 // loop_pre_header
      _
    $region3: #{tpu_custom_call.1} parent=1 // loop_header
      %s12 = sphi 0, %s16
      %p13 = scmp.ge.s32.totalorder %s12, 4
      %s20 = sphi 0, %s20
      %s22 = sphi 0, %s20
      %s23 = sphi 0, %s22
      %s37 = sphi 0, %s23
      %s41 = sphi 0, %s41
      %s43 = sphi 0, %s41
      %s44 = sphi 0, %s43
      %s58 = sphi 0, %s44
      %s64 = sphi 0, %s66
      %s67 = sphi 0, %s64
      %s68 = sphi 0, %s67
      %s84 = sphi 0, %s68
      %s90 = sphi 0, %s92
      %s93 = sphi 0, %s90
      %s94 = sphi 0, %s93
      %s110 = sphi 0, %s94
    $region4: #{tpu_custom_call.1} parent=1 // loop_header_branch
      %15 = sbr.rel (%p13) target = $region8
    $region5: #{tpu_custom_call.1} parent=1 // loop_body
      %s17 = ssub.s32 %s12, 1
      %s18 = ssub.s32 %s12, 2
      %s19 = sadd.s32 %s12, 1
      %s21 = sadd.s32 %s20, 1
      %p24 = scmp.eq.s32.totalorder %s12, 1
      %p25 = scmp.ne.s32.totalorder %s20, %s22
      %p26 = scmp.eq.s32.totalorder %s12, 0
      %p27 = por %p25, %p26
      %p28 = scmp.ne.s32.totalorder %s20, %s22
      %p29 = scmp.eq.s32.totalorder %s17, 1
      %p30 = por %p28, %p29
      %p31 = scmp.ne.s32.totalorder %s22, %s23
      %p32 = scmp.eq.s32.totalorder %s17, 0
      %p33 = por %p31, %p32
      %p34 = scmp.ne.s32.totalorder %s22, %s23
      %p35 = scmp.eq.s32.totalorder %s18, 1
      %p36 = por %p34, %p35
      %p38 = scmp.ne.s32.totalorder %s23, %s37
      %p39 = scmp.eq.s32.totalorder %s18, 0
      %p40 = por %p38, %p39
      %s42 = sadd.s32 %s41, 1
      %p45 = scmp.eq.s32.totalorder %s12, 1
      %p46 = scmp.ne.s32.totalorder %s41, %s43
      %p47 = scmp.eq.s32.totalorder %s12, 0
      %p48 = por %p46, %p47
      %p49 = scmp.ne.s32.totalorder %s41, %s43
      %p50 = scmp.eq.s32.totalorder %s17, 1
      %p51 = por %p49, %p50
      %p52 = scmp.ne.s32.totalorder %s43, %s44
      %p53 = scmp.eq.s32.totalorder %s17, 0
      %p54 = por %p52, %p53
      %p55 = scmp.ne.s32.totalorder %s43, %s44
      %p56 = scmp.eq.s32.totalorder %s18, 1
      %p57 = por %p55, %p56
      %p59 = scmp.ne.s32.totalorder %s44, %s58
      %p60 = scmp.eq.s32.totalorder %s18, 0
      %p61 = por %p59, %p60
      %s62 = ssub.s32 %s12, %s19
      %p63 = scmp.eq.s32.totalorder %s62, 0
      %s65 = sadd.s32 %s64, 1
      %s66 = scalar_select %p63, %s64, %s65
      %p69 = pneg %p63
      %p70 = scmp.eq.s32.totalorder %s12, 1
      %p71 = por %p69, %p70
      %p72 = scmp.ne.s32.totalorder %s64, %s67
      %p73 = scmp.eq.s32.totalorder %s12, 0
      %p74 = por %p72, %p73
      %p75 = scmp.ne.s32.totalorder %s64, %s67
      %p76 = scmp.eq.s32.totalorder %s17, 1
      %p77 = por %p75, %p76
      %p78 = scmp.ne.s32.totalorder %s67, %s68
      %p79 = scmp.eq.s32.totalorder %s17, 0
      %p80 = por %p78, %p79
      %p81 = scmp.ne.s32.totalorder %s67, %s68
      %p82 = scmp.eq.s32.totalorder %s18, 1
      %p83 = por %p81, %p82
      %p85 = scmp.ne.s32.totalorder %s68, %s84
      %p86 = scmp.eq.s32.totalorder %s18, 0
      %p87 = por %p85, %p86
      %s88 = ssub.s32 %s12, %s19
      %p89 = scmp.eq.s32.totalorder %s88, 0
      %s91 = sadd.s32 %s90, 1
      %s92 = scalar_select %p89, %s90, %s91
      %p95 = pneg %p89
      %p96 = scmp.eq.s32.totalorder %s12, 1
      %p97 = por %p95, %p96
      %p98 = scmp.ne.s32.totalorder %s90, %s93
      %p99 = scmp.eq.s32.totalorder %s12, 0
      %p100 = por %p98, %p99
      %p101 = scmp.ne.s32.totalorder %s90, %s93
      %p102 = scmp.eq.s32.totalorder %s17, 1
      %p103 = por %p101, %p102
      %p104 = scmp.ne.s32.totalorder %s93, %s94
      %p105 = scmp.eq.s32.totalorder %s17, 0
      %p106 = por %p104, %p105
      %p107 = scmp.ne.s32.totalorder %s93, %s94
      %p108 = scmp.eq.s32.totalorder %s18, 1
      %p109 = por %p107, %p108
      %p111 = scmp.ne.s32.totalorder %s94, %s110
      %p112 = scmp.eq.s32.totalorder %s18, 0
      %p113 = por %p111, %p112
      %p114 = scmp.le.s32.totalorder 1, %s12
      %p115 = scmp.lt.s32.totalorder %s12, 3
      %p116 = pnand %p114, %p115
      %p117 = pneg %p116
      // Predicated region
      $region9: #{tpu_custom_call.1} parent=5 // pred_check
        _
      $region10: #{tpu_custom_call.1} parent=5 // pred_check_branch
        %119 = sbr.rel (%p116) target = $region12
      $region11: #{tpu_custom_call.1} parent=5 // pred_region
        %s120 = ssub.s32 %s12, 1
        // Predicated region
        $region13: #{tpu_custom_call.1} parent=11 // pred_check
          %p121 = pneg %p33
        $region14: #{tpu_custom_call.1} parent=11 // pred_check_branch
          %123 = sbr.rel (%p121) target = $region16
        $region15: #{tpu_custom_call.1} parent=11 // pred_region
          _
        $region16: #{tpu_custom_call.1} parent=11 // pred_fallthru
          _
        // Predicated region
        $region17: #{tpu_custom_call.1} parent=11 // pred_check
          %p124 = pneg %p54
        $region18: #{tpu_custom_call.1} parent=11 // pred_check_branch
          %126 = sbr.rel (%p124) target = $region20
        $region19: #{tpu_custom_call.1} parent=11 // pred_region
          _
        $region20: #{tpu_custom_call.1} parent=11 // pred_fallthru
          _
      $region12: #{tpu_custom_call.1} parent=5 // pred_fallthru
        _
      %p127 = scmp.lt.s32.totalorder %s12, 2
      // Predicated region
      $region21: #{tpu_custom_call.1} parent=5 // pred_check
        %p128 = pneg %p127
      $region22: #{tpu_custom_call.1} parent=5 // pred_check_branch
        %130 = sbr.rel (%p128) target = $region24
      $region23: #{tpu_custom_call.1} parent=5 // pred_region
        // Predicated region
        $region25: #{tpu_custom_call.1} parent=23 // pred_check
          %p131 = pneg %p74
        $region26: #{tpu_custom_call.1} parent=23 // pred_check_branch
          %133 = sbr.rel (%p131) target = $region28
        $region27: #{tpu_custom_call.1} parent=23 // pred_region
          %p134 = scmp.lt.s32.totalorder %s12, 1
          %s135 = scalar_select %p134, %s12, 1
          %s136 = smul.addr %s135, 2
          %s137 = smul.addr %s136, 4
          %s138 = scalar_lea.vmem %s2, %s137
        $region28: #{tpu_custom_call.1} parent=23 // pred_fallthru
          _
      $region24: #{tpu_custom_call.1} parent=5 // pred_fallthru
        _
      %p139 = scmp.le.s32.totalorder 1, %s12
      %p140 = scmp.lt.s32.totalorder %s12, 3
      %p141 = pnand %p139, %p140
      %p142 = pneg %p141
      // Predicated region
      $region29: #{tpu_custom_call.1} parent=5 // pred_check
        _
      $region30: #{tpu_custom_call.1} parent=5 // pred_check_branch
        %144 = sbr.rel (%p141) target = $region32
      $region31: #{tpu_custom_call.1} parent=5 // pred_region
        %s145 = ssub.s32 %s12, 1
        %p146 = pneg %p33
        %p147 = pneg %p30
        %p148 = pneg %p54
        %p149 = pneg %p51
        %p150 = scmp.lt.s32.totalorder %s17, 1
        %s151 = scalar_select %p150, %s17, 1
        %s152 = smul.addr %s151, 2
        %s153 = smul.addr %s152, 4
        %s154 = scalar_lea.vmem %s2, %s153
        %p155 = pneg %p80
        %p156 = pneg %p77
        %p157 = pneg %p106
        %p158 = pneg %p103
        %s159 = sand.u32 %s93, 1
        %s160 = scalar_lea.sflag [#allocation3], %s159
        %s161 = sand.u32 %s93, 1
        %s162 = smul.addr %s161, 16
        %s163 = scalar_lea.vmem [#allocation2], %s162
        %p164 = scmp.lt.s32.totalorder %s17, 1
        %s165 = scalar_select %p164, %s17, 1
        %s166 = smul.addr %s165, 2
        %s167 = smul.addr %s166, 4
        %s168 = scalar_lea.vmem %s2, %s167
        %v169 = vld [vmem:[%s168] sm:$0xff]
        %v170 = vlaneseq
        %v171 = vand.u32 %v170, 127
        %v172 = vadd.s32 %v171, 128
        %vm173 = vcmp.lt.s32.totalorder %v171, 0
        %v174 = vsub.s32 0, %v171
        %v175 = vsel %vm173, %v174, %v171
        %v176 = vshrl.u32 %v175, 4
        %v177 = vand.u32 %v175, 15
        %v178 = vsub.s32 0, %v177
        %v179 = vsel %vm173, %v178, %v177
        %vm180 = vcmp.lt.s32.totalorder %v172, 0
        %v181 = vsub.s32 0, %v172
        %v182 = vsel %vm180, %v181, %v172
        %v183 = vshrl.u32 %v182, 4
        %v184 = vand.u32 %v182, 15
        %v185 = vsub.s32 0, %v184
        %v186 = vsel %vm180, %v185, %v184
        %vm187 = vcmp.ne.s32.totalorder %v179, 0
        %vm188 = vcmp.ne.s32.totalorder %v186, 0
        %vm189 = vcmp.lt.s32.totalorder %v179, 0
        %vm190 = vcmp.lt.s32.totalorder %v186, 0
        %vm191 = vmand %vm189, %vm187
        %vm192 = vmand %vm190, %vm188
        %v193 = vadd.s32 %v179, 16
        %v194 = vadd.s32 %v186, 16
        %v195 = vsel %vm191, %v193, %v179
        %v196 = vsel %vm192, %v194, %v186
        %v198 = vcombine.high %v169, %v169
        %199 = vrot.lane.b32.xlu0 %v169, 17
        %v200 = vpop.permute.xlu0 %199
        %201 = vrot.lane.b32.xlu0 %v198, 17
        %v202 = vpop.permute.xlu0 %201
        %vm203 = vcmask 138240
        %v204 = vsel %vm203, %v200, %v202
        %v207 = vsel %vm203, 0.0, %v200
        %208 = vrot.lane.b32.xlu0 %v169, 1
        %v209 = vpop.permute.xlu0 %208
        %210 = vrot.lane.b32.xlu0 %v198, 1
        %v211 = vpop.permute.xlu0 %210
        %vm212 = vcmask 7168
        %v213 = vsel %vm212, %v209, %v211
        %v216 = vsel %vm212, 0.0, %v209
        %vm217 = vcmp.lt.s32.totalorder %v195, 1
        %vm218 = vcmp.lt.s32.totalorder %v196, 1
        %v219 = vsel %vm217, %v216, %v207
        %v220 = vsel %vm218, %v213, %v204
        %v221 = vld [vmem:[%s0] sm:$0xff]
        %222 = vrot.lane.b32.xlu0 %v169, 16
        %v223 = vpop.permute.xlu0 %222
        %224 = vrot.lane.b32.xlu0 %v198, 16
        %v225 = vpop.permute.xlu0 %224
        %vm226 = vcmask 130048
        %v227 = vsel %vm226, %v223, %v225
        %v229 = vsel %vm226, 0.0, %v223
        %s230 = scalar_lea.vmem %s0, 8
        %v231 = vld [vmem:[%s230] sm:$0xff]
        %vm232 = vcmask 31744
        %v234 = vsel %vm232, %v231, 0
        %vm236 = vcmask 1043456
        %v238 = vsel %vm236, %v229, 0
        %v240 = vsel %vm236, %v227, 0
        %242 = vmatprep.subr.mxu0 %v240
        %243 = vmatpush1.msra.mxu0 %v238
        %244 = vmatprep.subr.mxu0 0.0
        %245 = vmatpush1.msra.mxu0 0.0
        %246 = vmatprep.subr.mxu0 0.0
        %247 = vmatpush1.msra.mxu0 0.0
        %248 = vmatprep.subr.mxu0 0.0
        %249 = vmatpush1.msra.mxu0 0.0
        %250 = vmatprep.subr.mxu0 0.0
        %251 = vmatpush1.msra.mxu0 0.0
        %252 = vmatprep.subr.mxu0 0.0
        %253 = vmatpush1.msra.mxu0 0.0
        %254 = vmatprep.subr.mxu0 0.0
        %255 = vmatpush1.msra.mxu0 0.0
        %256 = vmatprep.subr.mxu0 0.0
        %257 = vmatpush1.msra.mxu0 0.0
        %258 = vmatprep.subr.mxu0 0.0
        %259 = vmatpush1.msra.mxu0 0.0
        %260 = vmatprep.subr.mxu0 0.0
        %261 = vmatpush1.msra.mxu0 0.0
        %262 = vmatprep.subr.mxu0 0.0
        %263 = vmatpush1.msra.mxu0 0.0
        %264 = vmatprep.subr.mxu0 0.0
        %265 = vmatpush1.msra.mxu0 0.0
        %266 = vmatprep.subr.mxu0 0.0
        %267 = vmatpush1.msra.mxu0 0.0
        %268 = vmatprep.subr.mxu0 0.0
        %269 = vmatpush1.msra.mxu0 0.0
        %270 = vmatprep.subr.mxu0 0.0
        %271 = vmatpush1.msra.mxu0 0.0
        %272 = vmatprep.subr.mxu0 0.0
        %273 = vmatpush1.msra.mxu0 0.0
        %274 = vmatprep.subr.mxu0 0.0
        %275 = vmatpush1.msra.mxu0 0.0
        %276 = vmatprep.subr.mxu0 0.0
        %277 = vmatpush1.msra.mxu0 0.0
        %278 = vmatprep.subr.mxu0 0.0
        %279 = vmatpush1.msra.mxu0 0.0
        %280 = vmatprep.subr.mxu0 0.0
        %281 = vmatpush1.msra.mxu0 0.0
        %282 = vmatprep.subr.mxu0 0.0
        %283 = vmatpush1.msra.mxu0 0.0
        %284 = vmatprep.subr.mxu0 0.0
        %285 = vmatpush1.msra.mxu0 0.0
        %286 = vmatprep.subr.mxu0 0.0
        %287 = vmatpush1.msra.mxu0 0.0
        %288 = vmatprep.subr.mxu0 0.0
        %289 = vmatpush1.msra.mxu0 0.0
        %290 = vmatprep.subr.mxu0 0.0
        %291 = vmatpush1.msra.mxu0 0.0
        %292 = vmatprep.subr.mxu0 0.0
        %293 = vmatpush1.msra.mxu0 0.0
        %294 = vmatprep.subr.mxu0 0.0
        %295 = vmatpush1.msra.mxu0 0.0
        %296 = vmatprep.subr.mxu0 0.0
        %297 = vmatpush1.msra.mxu0 0.0
        %298 = vmatprep.subr.mxu0 0.0
        %299 = vmatpush1.msra.mxu0 0.0
        %300 = vmatprep.subr.mxu0 0.0
        %301 = vmatpush1.msra.mxu0 0.0
        %302 = vmatprep.subr.mxu0 0.0
        %303 = vmatpush1.msra.mxu0 0.0
        %304 = vmatprep.subr.mxu0 0.0
        %305 = vmatpush1.msra.mxu0 0.0
        %306 = vmatprep.mubr.f32.mxu0 0.0
        %307 = vmatmul.mubr.f32.gmra.mrb[0].mxu0 %v234
        %v308 = vpop.f32.mrb[0].mxu0
        %v309 = vadd.f32 0.0, %v308
        %v310 = vpop.f32.mrb[0].mxu0
        %v311 = vadd.f32 0.0, %v310
        %312 = vdwg.mxu0
        %v314 = vsel %vm232, %v221, 0
        %v317 = vsel %vm236, %v219, 0
        %v320 = vsel %vm236, %v220, 0
        %322 = vmatprep.subr.mxu0 %v320
        %323 = vmatpush1.msra.mxu0 %v317
        %324 = vmatprep.subr.mxu0 0.0
        %325 = vmatpush1.msra.mxu0 0.0
        %326 = vmatprep.subr.mxu0 0.0
        %327 = vmatpush1.msra.mxu0 0.0
        %328 = vmatprep.subr.mxu0 0.0
        %329 = vmatpush1.msra.mxu0 0.0
        %330 = vmatprep.subr.mxu0 0.0
        %331 = vmatpush1.msra.mxu0 0.0
        %332 = vmatprep.subr.mxu0 0.0
        %333 = vmatpush1.msra.mxu0 0.0
        %334 = vmatprep.subr.mxu0 0.0
        %335 = vmatpush1.msra.mxu0 0.0
        %336 = vmatprep.subr.mxu0 0.0
        %337 = vmatpush1.msra.mxu0 0.0
        %338 = vmatprep.subr.mxu0 0.0
        %339 = vmatpush1.msra.mxu0 0.0
        %340 = vmatprep.subr.mxu0 0.0
        %341 = vmatpush1.msra.mxu0 0.0
        %342 = vmatprep.subr.mxu0 0.0
        %343 = vmatpush1.msra.mxu0 0.0
        %344 = vmatprep.subr.mxu0 0.0
        %345 = vmatpush1.msra.mxu0 0.0
        %346 = vmatprep.subr.mxu0 0.0
        %347 = vmatpush1.msra.mxu0 0.0
        %348 = vmatprep.subr.mxu0 0.0
        %349 = vmatpush1.msra.mxu0 0.0
        %350 = vmatprep.subr.mxu0 0.0
        %351 = vmatpush1.msra.mxu0 0.0
        %352 = vmatprep.subr.mxu0 0.0
        %353 = vmatpush1.msra.mxu0 0.0
        %354 = vmatprep.subr.mxu0 0.0
        %355 = vmatpush1.msra.mxu0 0.0
        %356 = vmatprep.subr.mxu0 0.0
        %357 = vmatpush1.msra.mxu0 0.0
        %358 = vmatprep.subr.mxu0 0.0
        %359 = vmatpush1.msra.mxu0 0.0
        %360 = vmatprep.subr.mxu0 0.0
        %361 = vmatpush1.msra.mxu0 0.0
        %362 = vmatprep.subr.mxu0 0.0
        %363 = vmatpush1.msra.mxu0 0.0
        %364 = vmatprep.subr.mxu0 0.0
        %365 = vmatpush1.msra.mxu0 0.0
        %366 = vmatprep.subr.mxu0 0.0
        %367 = vmatpush1.msra.mxu0 0.0
        %368 = vmatprep.subr.mxu0 0.0
        %369 = vmatpush1.msra.mxu0 0.0
        %370 = vmatprep.subr.mxu0 0.0
        %371 = vmatpush1.msra.mxu0 0.0
        %372 = vmatprep.subr.mxu0 0.0
        %373 = vmatpush1.msra.mxu0 0.0
        %374 = vmatprep.subr.mxu0 0.0
        %375 = vmatpush1.msra.mxu0 0.0
        %376 = vmatprep.subr.mxu0 0.0
        %377 = vmatpush1.msra.mxu0 0.0
        %378 = vmatprep.subr.mxu0 0.0
        %379 = vmatpush1.msra.mxu0 0.0
        %380 = vmatprep.subr.mxu0 0.0
        %381 = vmatpush1.msra.mxu0 0.0
        %382 = vmatprep.subr.mxu0 0.0
        %383 = vmatpush1.msra.mxu0 0.0
        %384 = vmatprep.subr.mxu0 0.0
        %385 = vmatpush1.msra.mxu0 0.0
        %386 = vmatprep.mubr.f32.mxu0 0.0
        %387 = vmatmul.mubr.f32.gmra.mrb[0].mxu0 %v314
        %v388 = vpop.f32.mrb[0].mxu0
        %v389 = vadd.f32 %v309, %v388
        %v390 = vpop.f32.mrb[0].mxu0
        %v391 = vadd.f32 %v311, %v390
        %392 = vdwg.mxu0
        %393 = vrot.lane.b32.xlu0 %v169, 15
        %v394 = vpop.permute.xlu0 %393
        %395 = vrot.lane.b32.xlu0 %v198, 15
        %v396 = vpop.permute.xlu0 %395
        %vm397 = vcmask 121856
        %v398 = vsel %vm397, %v394, %v396
        %v401 = vsel %vm397, 0.0, %v394
        %402 = vrot.lane.b32.xlu0 %v169, 31
        %v403 = vpop.permute.xlu0 %402
        %404 = vrot.lane.b32.xlu0 %v198, 31
        %v405 = vpop.permute.xlu0 %404
        %vm406 = vcmask 252928
        %v407 = vsel %vm406, %v403, %v405
        %v410 = vsel %vm406, 0.0, %v403
        %vm411 = vcmp.ge.s32.totalorder %v195, 15
        %vm412 = vcmp.ge.s32.totalorder %v196, 15
        %v413 = vsel %vm411, %v410, %v401
        %v414 = vsel %vm412, %v407, %v398
        %s415 = scalar_lea.vmem %s0, 16
        %v416 = vld [vmem:[%s415] sm:$0xff]
        %v418 = vsel %vm232, %v416, 0
        %v421 = vsel %vm236, %v413, 0
        %v424 = vsel %vm236, %v414, 0
        %426 = vmatprep.subr.mxu0 %v424
        %427 = vmatpush1.msra.mxu0 %v421
        %428 = vmatprep.subr.mxu0 0.0
        %429 = vmatpush1.msra.mxu0 0.0
        %430 = vmatprep.subr.mxu0 0.0
        %431 = vmatpush1.msra.mxu0 0.0
        %432 = vmatprep.subr.mxu0 0.0
        %433 = vmatpush1.msra.mxu0 0.0
        %434 = vmatprep.subr.mxu0 0.0
        %435 = vmatpush1.msra.mxu0 0.0
        %436 = vmatprep.subr.mxu0 0.0
        %437 = vmatpush1.msra.mxu0 0.0
        %438 = vmatprep.subr.mxu0 0.0
        %439 = vmatpush1.msra.mxu0 0.0
        %440 = vmatprep.subr.mxu0 0.0
        %441 = vmatpush1.msra.mxu0 0.0
        %442 = vmatprep.subr.mxu0 0.0
        %443 = vmatpush1.msra.mxu0 0.0
        %444 = vmatprep.subr.mxu0 0.0
        %445 = vmatpush1.msra.mxu0 0.0
        %446 = vmatprep.subr.mxu0 0.0
        %447 = vmatpush1.msra.mxu0 0.0
        %448 = vmatprep.subr.mxu0 0.0
        %449 = vmatpush1.msra.mxu0 0.0
        %450 = vmatprep.subr.mxu0 0.0
        %451 = vmatpush1.msra.mxu0 0.0
        %452 = vmatprep.subr.mxu0 0.0
        %453 = vmatpush1.msra.mxu0 0.0
        %454 = vmatprep.subr.mxu0 0.0
        %455 = vmatpush1.msra.mxu0 0.0
        %456 = vmatprep.subr.mxu0 0.0
        %457 = vmatpush1.msra.mxu0 0.0
        %458 = vmatprep.subr.mxu0 0.0
        %459 = vmatpush1.msra.mxu0 0.0
        %460 = vmatprep.subr.mxu0 0.0
        %461 = vmatpush1.msra.mxu0 0.0
        %462 = vmatprep.subr.mxu0 0.0
        %463 = vmatpush1.msra.mxu0 0.0
        %464 = vmatprep.subr.mxu0 0.0
        %465 = vmatpush1.msra.mxu0 0.0
        %466 = vmatprep.subr.mxu0 0.0
        %467 = vmatpush1.msra.mxu0 0.0
        %468 = vmatprep.subr.mxu0 0.0
        %469 = vmatpush1.msra.mxu0 0.0
        %470 = vmatprep.subr.mxu0 0.0
        %471 = vmatpush1.msra.mxu0 0.0
        %472 = vmatprep.subr.mxu0 0.0
        %473 = vmatpush1.msra.mxu0 0.0
        %474 = vmatprep.subr.mxu0 0.0
        %475 = vmatpush1.msra.mxu0 0.0
        %476 = vmatprep.subr.mxu0 0.0
        %477 = vmatpush1.msra.mxu0 0.0
        %478 = vmatprep.subr.mxu0 0.0
        %479 = vmatpush1.msra.mxu0 0.0
        %480 = vmatprep.subr.mxu0 0.0
        %481 = vmatpush1.msra.mxu0 0.0
        %482 = vmatprep.subr.mxu0 0.0
        %483 = vmatpush1.msra.mxu0 0.0
        %484 = vmatprep.subr.mxu0 0.0
        %485 = vmatpush1.msra.mxu0 0.0
        %486 = vmatprep.subr.mxu0 0.0
        %487 = vmatpush1.msra.mxu0 0.0
        %488 = vmatprep.subr.mxu0 0.0
        %489 = vmatpush1.msra.mxu0 0.0
        %490 = vmatprep.mubr.f32.mxu0 0.0
        %491 = vmatmul.mubr.f32.gmra.mrb[0].mxu0 %v418
        %v492 = vpop.f32.mrb[0].mxu0
        %v493 = vadd.f32 0.0, %v492
        %v494 = vpop.f32.mrb[0].mxu0
        %v495 = vadd.f32 0.0, %v494
        %496 = vdwg.mxu0
        %v497 = vadd.f32 %v389, %v493
        %v498 = vadd.f32 %v391, %v495
        %499 = vrot.lane.b32.xlu0 %v169, 113
        %v500 = vpop.permute.xlu0 %499
        %501 = vrot.lane.b32.xlu0 %v198, 113
        %v502 = vpop.permute.xlu0 %501
        %vm503 = vcmask 924672
        %v504 = vsel %vm503, %v500, %v502
        %v507 = vsel %vm503, %v502, 0.0
        %v508 = vsel %vm217, %v504, %v216
        %v509 = vsel %vm218, %v507, %v213
        %s510 = scalar_lea.vmem %s0, 24
        %v511 = vld [vmem:[%s510] sm:$0xff]
        %v513 = vsel %vm232, %v511, 0
        %v516 = vsel %vm236, %v508, 0
        %v519 = vsel %vm236, %v509, 0
        %521 = vmatprep.subr.mxu0 %v519
        %522 = vmatpush1.msra.mxu0 %v516
        %523 = vmatprep.subr.mxu0 0.0
        %524 = vmatpush1.msra.mxu0 0.0
        %525 = vmatprep.subr.mxu0 0.0
        %526 = vmatpush1.msra.mxu0 0.0
        %527 = vmatprep.subr.mxu0 0.0
        %528 = vmatpush1.msra.mxu0 0.0
        %529 = vmatprep.subr.mxu0 0.0
        %530 = vmatpush1.msra.mxu0 0.0
        %531 = vmatprep.subr.mxu0 0.0
        %532 = vmatpush1.msra.mxu0 0.0
        %533 = vmatprep.subr.mxu0 0.0
        %534 = vmatpush1.msra.mxu0 0.0
        %535 = vmatprep.subr.mxu0 0.0
        %536 = vmatpush1.msra.mxu0 0.0
        %537 = vmatprep.subr.mxu0 0.0
        %538 = vmatpush1.msra.mxu0 0.0
        %539 = vmatprep.subr.mxu0 0.0
        %540 = vmatpush1.msra.mxu0 0.0
        %541 = vmatprep.subr.mxu0 0.0
        %542 = vmatpush1.msra.mxu0 0.0
        %543 = vmatprep.subr.mxu0 0.0
        %544 = vmatpush1.msra.mxu0 0.0
        %545 = vmatprep.subr.mxu0 0.0
        %546 = vmatpush1.msra.mxu0 0.0
        %547 = vmatprep.subr.mxu0 0.0
        %548 = vmatpush1.msra.mxu0 0.0
        %549 = vmatprep.subr.mxu0 0.0
        %550 = vmatpush1.msra.mxu0 0.0
        %551 = vmatprep.subr.mxu0 0.0
        %552 = vmatpush1.msra.mxu0 0.0
        %553 = vmatprep.subr.mxu0 0.0
        %554 = vmatpush1.msra.mxu0 0.0
        %555 = vmatprep.subr.mxu0 0.0
        %556 = vmatpush1.msra.mxu0 0.0
        %557 = vmatprep.subr.mxu0 0.0
        %558 = vmatpush1.msra.mxu0 0.0
        %559 = vmatprep.subr.mxu0 0.0
        %560 = vmatpush1.msra.mxu0 0.0
        %561 = vmatprep.subr.mxu0 0.0
        %562 = vmatpush1.msra.mxu0 0.0
        %563 = vmatprep.subr.mxu0 0.0
        %564 = vmatpush1.msra.mxu0 0.0
        %565 = vmatprep.subr.mxu0 0.0
        %566 = vmatpush1.msra.mxu0 0.0
        %567 = vmatprep.subr.mxu0 0.0
        %568 = vmatpush1.msra.mxu0 0.0
        %569 = vmatprep.subr.mxu0 0.0
        %570 = vmatpush1.msra.mxu0 0.0
        %571 = vmatprep.subr.mxu0 0.0
        %572 = vmatpush1.msra.mxu0 0.0
        %573 = vmatprep.subr.mxu0 0.0
        %574 = vmatpush1.msra.mxu0 0.0
        %575 = vmatprep.subr.mxu0 0.0
        %576 = vmatpush1.msra.mxu0 0.0
        %577 = vmatprep.subr.mxu0 0.0
        %578 = vmatpush1.msra.mxu0 0.0
        %579 = vmatprep.subr.mxu0 0.0
        %580 = vmatpush1.msra.mxu0 0.0
        %581 = vmatprep.subr.mxu0 0.0
        %582 = vmatpush1.msra.mxu0 0.0
        %583 = vmatprep.subr.mxu0 0.0
        %584 = vmatpush1.msra.mxu0 0.0
        %585 = vmatprep.mubr.f32.mxu0 0.0
        %586 = vmatmul.mubr.f32.gmra.mrb[0].mxu0 %v513
        %v587 = vpop.f32.mrb[0].mxu0
        %v588 = vadd.f32 0.0, %v587
        %v589 = vpop.f32.mrb[0].mxu0
        %v590 = vadd.f32 0.0, %v589
        %591 = vdwg.mxu0
        %v592 = vadd.f32 %v497, %v588
        %v593 = vadd.f32 %v498, %v590
        %s594 = scalar_lea.vmem %s0, 32
        %v595 = vld [vmem:[%s594] sm:$0xff]
        %v597 = vsel %vm232, %v595, 0
        %v599 = vsel %vm236, %v169, 0
        %v601 = vsel %vm236, %v198, 0
        %603 = vmatprep.subr.mxu0 %v601
        %604 = vmatpush1.msra.mxu0 %v599
        %605 = vmatprep.subr.mxu0 0.0
        %606 = vmatpush1.msra.mxu0 0.0
        %607 = vmatprep.subr.mxu0 0.0
        %608 = vmatpush1.msra.mxu0 0.0
        %609 = vmatprep.subr.mxu0 0.0
        %610 = vmatpush1.msra.mxu0 0.0
        %611 = vmatprep.subr.mxu0 0.0
        %612 = vmatpush1.msra.mxu0 0.0
        %613 = vmatprep.subr.mxu0 0.0
        %614 = vmatpush1.msra.mxu0 0.0
        %615 = vmatprep.subr.mxu0 0.0
        %616 = vmatpush1.msra.mxu0 0.0
        %617 = vmatprep.subr.mxu0 0.0
        %618 = vmatpush1.msra.mxu0 0.0
        %619 = vmatprep.subr.mxu0 0.0
        %620 = vmatpush1.msra.mxu0 0.0
        %621 = vmatprep.subr.mxu0 0.0
        %622 = vmatpush1.msra.mxu0 0.0
        %623 = vmatprep.subr.mxu0 0.0
        %624 = vmatpush1.msra.mxu0 0.0
        %625 = vmatprep.subr.mxu0 0.0
        %626 = vmatpush1.msra.mxu0 0.0
        %627 = vmatprep.subr.mxu0 0.0
        %628 = vmatpush1.msra.mxu0 0.0
        %629 = vmatprep.subr.mxu0 0.0
        %630 = vmatpush1.msra.mxu0 0.0
        %631 = vmatprep.subr.mxu0 0.0
        %632 = vmatpush1.msra.mxu0 0.0
        %633 = vmatprep.subr.mxu0 0.0
        %634 = vmatpush1.msra.mxu0 0.0
        %635 = vmatprep.subr.mxu0 0.0
        %636 = vmatpush1.msra.mxu0 0.0
        %637 = vmatprep.subr.mxu0 0.0
        %638 = vmatpush1.msra.mxu0 0.0
        %639 = vmatprep.subr.mxu0 0.0
        %640 = vmatpush1.msra.mxu0 0.0
        %641 = vmatprep.subr.mxu0 0.0
        %642 = vmatpush1.msra.mxu0 0.0
        %643 = vmatprep.subr.mxu0 0.0
        %644 = vmatpush1.msra.mxu0 0.0
        %645 = vmatprep.subr.mxu0 0.0
        %646 = vmatpush1.msra.mxu0 0.0
        %647 = vmatprep.subr.mxu0 0.0
        %648 = vmatpush1.msra.mxu0 0.0
        %649 = vmatprep.subr.mxu0 0.0
        %650 = vmatpush1.msra.mxu0 0.0
        %651 = vmatprep.subr.mxu0 0.0
        %652 = vmatpush1.msra.mxu0 0.0
        %653 = vmatprep.subr.mxu0 0.0
        %654 = vmatpush1.msra.mxu0 0.0
        %655 = vmatprep.subr.mxu0 0.0
        %656 = vmatpush1.msra.mxu0 0.0
        %657 = vmatprep.subr.mxu0 0.0
        %658 = vmatpush1.msra.mxu0 0.0
        %659 = vmatprep.subr.mxu0 0.0
        %660 = vmatpush1.msra.mxu0 0.0
        %661 = vmatprep.subr.mxu0 0.0
        %662 = vmatpush1.msra.mxu0 0.0
        %663 = vmatprep.subr.mxu0 0.0
        %664 = vmatpush1.msra.mxu0 0.0
        %665 = vmatprep.subr.mxu0 0.0
        %666 = vmatpush1.msra.mxu0 0.0
        %667 = vmatprep.mubr.f32.mxu0 0.0
        %668 = vmatmul.mubr.f32.gmra.mrb[0].mxu0 %v597
        %v669 = vpop.f32.mrb[0].mxu0
        %v670 = vadd.f32 0.0, %v669
        %v671 = vpop.f32.mrb[0].mxu0
        %v672 = vadd.f32 0.0, %v671
        %673 = vdwg.mxu0
        %v674 = vadd.f32 %v592, %v670
        %v675 = vadd.f32 %v593, %v672
        %676 = vrot.lane.b32.xlu0 %v169, 127
        %v677 = vpop.permute.xlu0 %676
        %678 = vrot.lane.b32.xlu0 %v198, 127
        %v679 = vpop.permute.xlu0 %678
        %vm680 = vcmask 1039360
        %v681 = vsel %vm680, %v677, %v679
        %v684 = vsel %vm680, %v679, 0.0
        %v685 = vsel %vm411, %v401, %v681
        %v686 = vsel %vm412, %v398, %v684
        %s687 = scalar_lea.vmem %s0, 40
        %v688 = vld [vmem:[%s687] sm:$0xff]
        %v690 = vsel %vm232, %v688, 0
        %v693 = vsel %vm236, %v685, 0
        %v696 = vsel %vm236, %v686, 0
        %698 = vmatprep.subr.mxu0 %v696
        %699 = vmatpush1.msra.mxu0 %v693
        %700 = vmatprep.subr.mxu0 0.0
        %701 = vmatpush1.msra.mxu0 0.0
        %702 = vmatprep.subr.mxu0 0.0
        %703 = vmatpush1.msra.mxu0 0.0
        %704 = vmatprep.subr.mxu0 0.0
        %705 = vmatpush1.msra.mxu0 0.0
        %706 = vmatprep.subr.mxu0 0.0
        %707 = vmatpush1.msra.mxu0 0.0
        %708 = vmatprep.subr.mxu0 0.0
        %709 = vmatpush1.msra.mxu0 0.0
        %710 = vmatprep.subr.mxu0 0.0
        %711 = vmatpush1.msra.mxu0 0.0
        %712 = vmatprep.subr.mxu0 0.0
        %713 = vmatpush1.msra.mxu0 0.0
        %714 = vmatprep.subr.mxu0 0.0
        %715 = vmatpush1.msra.mxu0 0.0
        %716 = vmatprep.subr.mxu0 0.0
        %717 = vmatpush1.msra.mxu0 0.0
        %718 = vmatprep.subr.mxu0 0.0
        %719 = vmatpush1.msra.mxu0 0.0
        %720 = vmatprep.subr.mxu0 0.0
        %721 = vmatpush1.msra.mxu0 0.0
        %722 = vmatprep.subr.mxu0 0.0
        %723 = vmatpush1.msra.mxu0 0.0
        %724 = vmatprep.subr.mxu0 0.0
        %725 = vmatpush1.msra.mxu0 0.0
        %726 = vmatprep.subr.mxu0 0.0
        %727 = vmatpush1.msra.mxu0 0.0
        %728 = vmatprep.subr.mxu0 0.0
        %729 = vmatpush1.msra.mxu0 0.0
        %730 = vmatprep.subr.mxu0 0.0
        %731 = vmatpush1.msra.mxu0 0.0
        %732 = vmatprep.subr.mxu0 0.0
        %733 = vmatpush1.msra.mxu0 0.0
        %734 = vmatprep.subr.mxu0 0.0
        %735 = vmatpush1.msra.mxu0 0.0
        %736 = vmatprep.subr.mxu0 0.0
        %737 = vmatpush1.msra.mxu0 0.0
        %738 = vmatprep.subr.mxu0 0.0
        %739 = vmatpush1.msra.mxu0 0.0
        %740 = vmatprep.subr.mxu0 0.0
        %741 = vmatpush1.msra.mxu0 0.0
        %742 = vmatprep.subr.mxu0 0.0
        %743 = vmatpush1.msra.mxu0 0.0
        %744 = vmatprep.subr.mxu0 0.0
        %745 = vmatpush1.msra.mxu0 0.0
        %746 = vmatprep.subr.mxu0 0.0
        %747 = vmatpush1.msra.mxu0 0.0
        %748 = vmatprep.subr.mxu0 0.0
        %749 = vmatpush1.msra.mxu0 0.0
        %750 = vmatprep.subr.mxu0 0.0
        %751 = vmatpush1.msra.mxu0 0.0
        %752 = vmatprep.subr.mxu0 0.0
        %753 = vmatpush1.msra.mxu0 0.0
        %754 = vmatprep.subr.mxu0 0.0
        %755 = vmatpush1.msra.mxu0 0.0
        %756 = vmatprep.subr.mxu0 0.0
        %757 = vmatpush1.msra.mxu0 0.0
        %758 = vmatprep.subr.mxu0 0.0
        %759 = vmatpush1.msra.mxu0 0.0
        %760 = vmatprep.subr.mxu0 0.0
        %761 = vmatpush1.msra.mxu0 0.0
        %762 = vmatprep.mubr.f32.mxu0 0.0
        %763 = vmatmul.mubr.f32.gmra.mrb[0].mxu0 %v690
        %v764 = vpop.f32.mrb[0].mxu0
        %v765 = vadd.f32 0.0, %v764
        %v766 = vpop.f32.mrb[0].mxu0
        %v767 = vadd.f32 0.0, %v766
        %768 = vdwg.mxu0
        %v769 = vadd.f32 %v674, %v765
        %v770 = vadd.f32 %v675, %v767
        %771 = vrot.lane.b32.xlu0 %v169, 97
        %v772 = vpop.permute.xlu0 %771
        %773 = vrot.lane.b32.xlu0 %v198, 97
        %v774 = vpop.permute.xlu0 %773
        %vm775 = vcmask 793600
        %v776 = vsel %vm775, %v772, %v774
        %v779 = vsel %vm775, %v774, 0.0
        %v780 = vsel %vm217, %v776, %v504
        %v781 = vsel %vm218, %v779, %v507
        %s782 = scalar_lea.vmem %s0, 48
        %v783 = vld [vmem:[%s782] sm:$0xff]
        %v785 = vsel %vm232, %v783, 0
        %v788 = vsel %vm236, %v780, 0
        %v791 = vsel %vm236, %v781, 0
        %793 = vmatprep.subr.mxu0 %v791
        %794 = vmatpush1.msra.mxu0 %v788
        %795 = vmatprep.subr.mxu0 0.0
        %796 = vmatpush1.msra.mxu0 0.0
        %797 = vmatprep.subr.mxu0 0.0
        %798 = vmatpush1.msra.mxu0 0.0
        %799 = vmatprep.subr.mxu0 0.0
        %800 = vmatpush1.msra.mxu0 0.0
        %801 = vmatprep.subr.mxu0 0.0
        %802 = vmatpush1.msra.mxu0 0.0
        %803 = vmatprep.subr.mxu0 0.0
        %804 = vmatpush1.msra.mxu0 0.0
        %805 = vmatprep.subr.mxu0 0.0
        %806 = vmatpush1.msra.mxu0 0.0
        %807 = vmatprep.subr.mxu0 0.0
        %808 = vmatpush1.msra.mxu0 0.0
        %809 = vmatprep.subr.mxu0 0.0
        %810 = vmatpush1.msra.mxu0 0.0
        %811 = vmatprep.subr.mxu0 0.0
        %812 = vmatpush1.msra.mxu0 0.0
        %813 = vmatprep.subr.mxu0 0.0
        %814 = vmatpush1.msra.mxu0 0.0
        %815 = vmatprep.subr.mxu0 0.0
        %816 = vmatpush1.msra.mxu0 0.0
        %817 = vmatprep.subr.mxu0 0.0
        %818 = vmatpush1.msra.mxu0 0.0
        %819 = vmatprep.subr.mxu0 0.0
        %820 = vmatpush1.msra.mxu0 0.0
        %821 = vmatprep.subr.mxu0 0.0
        %822 = vmatpush1.msra.mxu0 0.0
        %823 = vmatprep.subr.mxu0 0.0
        %824 = vmatpush1.msra.mxu0 0.0
        %825 = vmatprep.subr.mxu0 0.0
        %826 = vmatpush1.msra.mxu0 0.0
        %827 = vmatprep.subr.mxu0 0.0
        %828 = vmatpush1.msra.mxu0 0.0
        %829 = vmatprep.subr.mxu0 0.0
        %830 = vmatpush1.msra.mxu0 0.0
        %831 = vmatprep.subr.mxu0 0.0
        %832 = vmatpush1.msra.mxu0 0.0
        %833 = vmatprep.subr.mxu0 0.0
        %834 = vmatpush1.msra.mxu0 0.0
        %835 = vmatprep.subr.mxu0 0.0
        %836 = vmatpush1.msra.mxu0 0.0
        %837 = vmatprep.subr.mxu0 0.0
        %838 = vmatpush1.msra.mxu0 0.0
        %839 = vmatprep.subr.mxu0 0.0
        %840 = vmatpush1.msra.mxu0 0.0
        %841 = vmatprep.subr.mxu0 0.0
        %842 = vmatpush1.msra.mxu0 0.0
        %843 = vmatprep.subr.mxu0 0.0
        %844 = vmatpush1.msra.mxu0 0.0
        %845 = vmatprep.subr.mxu0 0.0
        %846 = vmatpush1.msra.mxu0 0.0
        %847 = vmatprep.subr.mxu0 0.0
        %848 = vmatpush1.msra.mxu0 0.0
        %849 = vmatprep.subr.mxu0 0.0
        %850 = vmatpush1.msra.mxu0 0.0
        %851 = vmatprep.subr.mxu0 0.0
        %852 = vmatpush1.msra.mxu0 0.0
        %853 = vmatprep.subr.mxu0 0.0
        %854 = vmatpush1.msra.mxu0 0.0
        %855 = vmatprep.subr.mxu0 0.0
        %856 = vmatpush1.msra.mxu0 0.0
        %857 = vmatprep.mubr.f32.mxu0 0.0
        %858 = vmatmul.mubr.f32.gmra.mrb[0].mxu0 %v785
        %v859 = vpop.f32.mrb[0].mxu0
        %v860 = vadd.f32 0.0, %v859
        %v861 = vpop.f32.mrb[0].mxu0
        %v862 = vadd.f32 0.0, %v861
        %863 = vdwg.mxu0
        %v864 = vadd.f32 %v769, %v860
        %v865 = vadd.f32 %v770, %v862
        %866 = vrot.lane.b32.xlu0 %v169, 112
        %v867 = vpop.permute.xlu0 %866
        %868 = vrot.lane.b32.xlu0 %v198, 112
        %v869 = vpop.permute.xlu0 %868
        %vm870 = vcmask 916480
        %v871 = vsel %vm870, %v867, %v869
        %v873 = vsel %vm870, %v869, 0.0
        %s874 = scalar_lea.vmem %s0, 56
        %v875 = vld [vmem:[%s874] sm:$0xff]
        %v877 = vsel %vm232, %v875, 0
        %v879 = vsel %vm236, %v871, 0
        %v882 = vsel %vm236, %v873, 0
        %884 = vmatprep.subr.mxu0 %v882
        %885 = vmatpush1.msra.mxu0 %v879
        %886 = vmatprep.subr.mxu0 0.0
        %887 = vmatpush1.msra.mxu0 0.0
        %888 = vmatprep.subr.mxu0 0.0
        %889 = vmatpush1.msra.mxu0 0.0
        %890 = vmatprep.subr.mxu0 0.0
        %891 = vmatpush1.msra.mxu0 0.0
        %892 = vmatprep.subr.mxu0 0.0
        %893 = vmatpush1.msra.mxu0 0.0
        %894 = vmatprep.subr.mxu0 0.0
        %895 = vmatpush1.msra.mxu0 0.0
        %896 = vmatprep.subr.mxu0 0.0
        %897 = vmatpush1.msra.mxu0 0.0
        %898 = vmatprep.subr.mxu0 0.0
        %899 = vmatpush1.msra.mxu0 0.0
        %900 = vmatprep.subr.mxu0 0.0
        %901 = vmatpush1.msra.mxu0 0.0
        %902 = vmatprep.subr.mxu0 0.0
        %903 = vmatpush1.msra.mxu0 0.0
        %904 = vmatprep.subr.mxu0 0.0
        %905 = vmatpush1.msra.mxu0 0.0
        %906 = vmatprep.subr.mxu0 0.0
        %907 = vmatpush1.msra.mxu0 0.0
        %908 = vmatprep.subr.mxu0 0.0
        %909 = vmatpush1.msra.mxu0 0.0
        %910 = vmatprep.subr.mxu0 0.0
        %911 = vmatpush1.msra.mxu0 0.0
        %912 = vmatprep.subr.mxu0 0.0
        %913 = vmatpush1.msra.mxu0 0.0
        %914 = vmatprep.subr.mxu0 0.0
        %915 = vmatpush1.msra.mxu0 0.0
        %916 = vmatprep.subr.mxu0 0.0
        %917 = vmatpush1.msra.mxu0 0.0
        %918 = vmatprep.subr.mxu0 0.0
        %919 = vmatpush1.msra.mxu0 0.0
        %920 = vmatprep.subr.mxu0 0.0
        %921 = vmatpush1.msra.mxu0 0.0
        %922 = vmatprep.subr.mxu0 0.0
        %923 = vmatpush1.msra.mxu0 0.0
        %924 = vmatprep.subr.mxu0 0.0
        %925 = vmatpush1.msra.mxu0 0.0
        %926 = vmatprep.subr.mxu0 0.0
        %927 = vmatpush1.msra.mxu0 0.0
        %928 = vmatprep.subr.mxu0 0.0
        %929 = vmatpush1.msra.mxu0 0.0
        %930 = vmatprep.subr.mxu0 0.0
        %931 = vmatpush1.msra.mxu0 0.0
        %932 = vmatprep.subr.mxu0 0.0
        %933 = vmatpush1.msra.mxu0 0.0
        %934 = vmatprep.subr.mxu0 0.0
        %935 = vmatpush1.msra.mxu0 0.0
        %936 = vmatprep.subr.mxu0 0.0
        %937 = vmatpush1.msra.mxu0 0.0
        %938 = vmatprep.subr.mxu0 0.0
        %939 = vmatpush1.msra.mxu0 0.0
        %940 = vmatprep.subr.mxu0 0.0
        %941 = vmatpush1.msra.mxu0 0.0
        %942 = vmatprep.subr.mxu0 0.0
        %943 = vmatpush1.msra.mxu0 0.0
        %944 = vmatprep.subr.mxu0 0.0
        %945 = vmatpush1.msra.mxu0 0.0
        %946 = vmatprep.subr.mxu0 0.0
        %947 = vmatpush1.msra.mxu0 0.0
        %948 = vmatprep.mubr.f32.mxu0 0.0
        %949 = vmatmul.mubr.f32.gmra.mrb[0].mxu0 %v877
        %v950 = vpop.f32.mrb[0].mxu0
        %v951 = vadd.f32 0.0, %v950
        %v952 = vpop.f32.mrb[0].mxu0
        %v953 = vadd.f32 0.0, %v952
        %954 = vdwg.mxu0
        %v955 = vadd.f32 %v864, %v951
        %v956 = vadd.f32 %v865, %v953
        %957 = vrot.lane.b32.xlu0 %v169, 111
        %v958 = vpop.permute.xlu0 %957
        %959 = vrot.lane.b32.xlu0 %v198, 111
        %v960 = vpop.permute.xlu0 %959
        %vm961 = vcmask 908288
        %v962 = vsel %vm961, %v958, %v960
        %v965 = vsel %vm961, %v960, 0.0
        %v966 = vsel %vm411, %v681, %v962
        %v967 = vsel %vm412, %v684, %v965
        %s968 = scalar_lea.vmem %s0, 64
        %v969 = vld [vmem:[%s968] sm:$0xff]
        %v971 = vsel %vm232, %v969, 0
        %v974 = vsel %vm236, %v966, 0
        %v977 = vsel %vm236, %v967, 0
        %979 = vmatprep.subr.mxu0 %v977
        %980 = vmatpush1.msra.mxu0 %v974
        %981 = vmatprep.subr.mxu0 0.0
        %982 = vmatpush1.msra.mxu0 0.0
        %983 = vmatprep.subr.mxu0 0.0
        %984 = vmatpush1.msra.mxu0 0.0
        %985 = vmatprep.subr.mxu0 0.0
        %986 = vmatpush1.msra.mxu0 0.0
        %987 = vmatprep.subr.mxu0 0.0
        %988 = vmatpush1.msra.mxu0 0.0
        %989 = vmatprep.subr.mxu0 0.0
        %990 = vmatpush1.msra.mxu0 0.0
        %991 = vmatprep.subr.mxu0 0.0
        %992 = vmatpush1.msra.mxu0 0.0
        %993 = vmatprep.subr.mxu0 0.0
        %994 = vmatpush1.msra.mxu0 0.0
        %995 = vmatprep.subr.mxu0 0.0
        %996 = vmatpush1.msra.mxu0 0.0
        %997 = vmatprep.subr.mxu0 0.0
        %998 = vmatpush1.msra.mxu0 0.0
        %999 = vmatprep.subr.mxu0 0.0
        %1000 = vmatpush1.msra.mxu0 0.0
        %1001 = vmatprep.subr.mxu0 0.0
        %1002 = vmatpush1.msra.mxu0 0.0
        %1003 = vmatprep.subr.mxu0 0.0
        %1004 = vmatpush1.msra.mxu0 0.0
        %1005 = vmatprep.subr.mxu0 0.0
        %1006 = vmatpush1.msra.mxu0 0.0
        %1007 = vmatprep.subr.mxu0 0.0
        %1008 = vmatpush1.msra.mxu0 0.0
        %1009 = vmatprep.subr.mxu0 0.0
        %1010 = vmatpush1.msra.mxu0 0.0
        %1011 = vmatprep.subr.mxu0 0.0
        %1012 = vmatpush1.msra.mxu0 0.0
        %1013 = vmatprep.subr.mxu0 0.0
        %1014 = vmatpush1.msra.mxu0 0.0
        %1015 = vmatprep.subr.mxu0 0.0
        %1016 = vmatpush1.msra.mxu0 0.0
        %1017 = vmatprep.subr.mxu0 0.0
        %1018 = vmatpush1.msra.mxu0 0.0
        %1019 = vmatprep.subr.mxu0 0.0
        %1020 = vmatpush1.msra.mxu0 0.0
        %1021 = vmatprep.subr.mxu0 0.0
        %1022 = vmatpush1.msra.mxu0 0.0
        %1023 = vmatprep.subr.mxu0 0.0
        %1024 = vmatpush1.msra.mxu0 0.0
        %1025 = vmatprep.subr.mxu0 0.0
        %1026 = vmatpush1.msra.mxu0 0.0
        %1027 = vmatprep.subr.mxu0 0.0
        %1028 = vmatpush1.msra.mxu0 0.0
        %1029 = vmatprep.subr.mxu0 0.0
        %1030 = vmatpush1.msra.mxu0 0.0
        %1031 = vmatprep.subr.mxu0 0.0
        %1032 = vmatpush1.msra.mxu0 0.0
        %1033 = vmatprep.subr.mxu0 0.0
        %1034 = vmatpush1.msra.mxu0 0.0
        %1035 = vmatprep.subr.mxu0 0.0
        %1036 = vmatpush1.msra.mxu0 0.0
        %1037 = vmatprep.subr.mxu0 0.0
        %1038 = vmatpush1.msra.mxu0 0.0
        %1039 = vmatprep.subr.mxu0 0.0
        %1040 = vmatpush1.msra.mxu0 0.0
        %1041 = vmatprep.subr.mxu0 0.0
        %1042 = vmatpush1.msra.mxu0 0.0
        %1043 = vmatprep.mubr.f32.mxu0 0.0
        %1044 = vmatmul.mubr.f32.gmra.mrb[0].mxu0 %v971
        %v1045 = vpop.f32.mrb[0].mxu0
        %v1046 = vadd.f32 0.0, %v1045
        %v1047 = vpop.f32.mrb[0].mxu0
        %v1048 = vadd.f32 0.0, %v1047
        %1049 = vdwg.mxu0
        %v1050 = vadd.f32 %v955, %v1046
        %v1051 = vadd.f32 %v956, %v1048
        %v1052 = vld [vmem:[%s1] sm:$0xff]
        %1054 = vset.pattern.permute.xlu0 0
        %1055 = vperm.xlu0 %1054, %v1052
        %v1056 = vpop.permute.xlu0 %1055
        %v1058 = vadd.f32 %v1050, %v1056
        %v1059 = vadd.f32 %v1051, %v1056
        %1060 = vst [vmem:[%s163] sm:$0xff] %v1058
        %1061 = vst [vmem:[%s163 + $0x8] sm:$0xff] %v1059
        %s1062 = sand.u32 %s93, 1
        %s1063 = scalar_lea.sflag [#allocation3], %s1062
        %s1064 = sand.u32 %s93, 1
        %s1065 = smul.addr %s1064, 16
        %s1066 = scalar_lea.vmem [#allocation2], %s1065
        // Predicated region
        $region33: #{tpu_custom_call.1} parent=31 // pred_check
          %p1067 = pneg %p103
        $region34: #{tpu_custom_call.1} parent=31 // pred_check_branch
          %1069 = sbr.rel (%p1067) target = $region36
        $region35: #{tpu_custom_call.1} parent=31 // pred_region
          %s1071 = ssub.s32 256, 256
          %1072 = vsyncadd %s1063, %s1071
          %s1073 = smul.addr %s17, 2
          %s1074 = smul.addr %s1073, 128
          %s1075 = scalar_lea.hbm %s3, %s1074
          %s1077 = sshll.u32 %s1066, 4
          %s1078 = int_to_ptr.vmem [resolvable:$true] %s1077
          %1080 = dma.vmem_to_hbm [thread:$0]  %s1078, 256, %s1075, %s1063
        $region36: #{tpu_custom_call.1} parent=31 // pred_fallthru
          _
      $region32: #{tpu_custom_call.1} parent=5 // pred_fallthru
        _
      %p1081 = scmp.le.s32.totalorder 2, %s12
      // Predicated region
      $region37: #{tpu_custom_call.1} parent=5 // pred_check
        %p1082 = pneg %p1081
      $region38: #{tpu_custom_call.1} parent=5 // pred_check_branch
        %1084 = sbr.rel (%p1082) target = $region40
      $region39: #{tpu_custom_call.1} parent=5 // pred_region
        %s1085 = ssub.s32 %s12, 2
        // Predicated region
        $region41: #{tpu_custom_call.1} parent=39 // pred_check
          %p1086 = pneg %p109
        $region42: #{tpu_custom_call.1} parent=39 // pred_check_branch
          %1088 = sbr.rel (%p1086) target = $region44
        $region43: #{tpu_custom_call.1} parent=39 // pred_region
          %s1089 = sand.u32 %s94, 1
          %s1090 = scalar_lea.sflag [#allocation3], %s1089
          %s1091 = sand.u32 %s94, 1
          %s1092 = smul.addr %s1091, 16
          %s1093 = scalar_lea.vmem [#allocation2], %s1092
          %1094 = dma.done %s1090, 256
        $region44: #{tpu_custom_call.1} parent=39 // pred_fallthru
          _
      $region40: #{tpu_custom_call.1} parent=5 // pred_fallthru
        _
    $region6: #{tpu_custom_call.1} parent=1 // loop_footer
      %s16 = sadd.s32 1, %s12
    $region7: #{tpu_custom_call.1} parent=1 // loop_footer_branch
      %11 = sbr.rel target = $region3
    $region8: #{tpu_custom_call.1} parent=1 // loop_exit
      _
    %1095 = vsyncpa [#allocation3], 1
    %s1096 = scalar_lea.sflag [#allocation3], 1
    %1097 = vsyncpa %s1096, 1

</llo_original>
